<compile_context>
chip_gen: v7x
topology: tpu7x:2x2x1
jax: 0.10.0
libtpu: 0.0.40
codegen_flags: <defaults>
</compile_context>

<pallas_src>
import numpy as np

import jax
import jax.numpy as jnp
from jax import lax
from jax.experimental import pallas as pl
from jax.experimental.pallas import tpu as pltpu


# ----------------------------------------------------------------------------
# Fused kernel: NB batch images per grid step.
# ----------------------------------------------------------------------------
def _fused_conv_block_kernel(x_ref, w1_ref, b1_ref, w2_ref, b2_ref, o_ref):
    """relu(conv2(relu(conv1(x)))) for NB images, in (NB, H, W*C) folded layout.

    x_ref : (NB, H, W*Cin)          bf16 input tile (cast once in the wrapper)
    w1_ref: (3*W*Cin,  W*Cout)      bf16 block-Toeplitz conv1 weights (dy on K)
    b1_ref: (1, W*Cout)             f32 conv1 bias, tiled per output column
    w2_ref: (3*W*Cout, W*Cout)      bf16 block-Toeplitz conv2 weights (dy on K)
    b2_ref: (1, W*Cout)             f32 conv2 bias
    o_ref : (NB, H, W*Cout)         f32 output tile (lane-dense, 128-wide store)
    """
    cdt = w1_ref.dtype  # MXU compute dtype (bf16); accumulate in f32

    def conv3x3_relu(x3d, w_ref, b_ref, out_dtype):
        # x3d: (NB, H, WC) in compute dtype.  'same' padding along W is folded
        # into the Toeplitz weights; along H it is a per-image zero row, and
        # the dy shifts are done on axis=1 of the (NB, H, WC) view so rows
        # never leak across image boundaries.
        nb, h, wc = x3d.shape
        zrow = jnp.zeros((nb, 1, wc), x3d.dtype)
        up = jnp.concatenate([zrow, x3d[:, :h - 1, :]], axis=1)   # dy=0 -> row h-1
        dn = jnp.concatenate([x3d[:, 1:, :], zrow], axis=1)       # dy=2 -> row h+1
        # Single MXU dot per conv: concat the 3 dy operands along K (K = 3*WC).
        lhs = jnp.concatenate([up, x3d, dn], axis=2).reshape(nb * h, 3 * wc)
        # Bias-initialized f32 accumulator (no zeros init + add).
        acc = jnp.broadcast_to(b_ref[...], (nb * h, b_ref.shape[1])).astype(jnp.float32)
        acc = acc + jnp.dot(lhs, w_ref[...], preferred_element_type=jnp.float32)
        return jnp.maximum(acc, 0.0).astype(out_dtype).reshape(nb, h, -1)

    # conv1 + ReLU: intermediate stays on-chip; cast to bf16 ONCE for conv2.
    h1 = conv3x3_relu(x_ref[...], w1_ref, b1_ref, cdt)
    # conv2 + ReLU: lane-dense f32 store.
    o_ref[...] = conv3x3_relu(h1, w2_ref, b2_ref, o_ref.dtype)


# ----------------------------------------------------------------------------
# One-time weight packing (host side): block-Toeplitz over W, dy stacked on K.
# ----------------------------------------------------------------------------
def pack_conv_block_params(params, W, compute_dtype=jnp.bfloat16):
    """Pack (w1, b1, w2, b2) for the kernel.

    w (3,3,Cin,Cout) HWIO -> wt (3*W*Cin, W*Cout) with
      wt[dy*W*Cin + wi*Cin + c, wo*Cout + co] = w[dy, wi - wo + 1, c, co]
    for |wi - wo| <= 1 (missing entries realize the 'same' zero padding along W).
    b (Cout,) -> (1, W*Cout) tiled per output pixel column.
    """
    w1, b1, w2, b2 = params

    def toeplitz(w):
        w = np.asarray(jax.device_get(w), np.float32)          # (3, 3, Cin, Cout)
        _, _, cin, cout = w.shape
        t = np.zeros((3, W * cin, W * cout), np.float32)
        for wo in range(W):
            for dx in range(3):
                wi = wo + dx - 1
                if 0 <= wi < W:
                    t[:, wi * cin:(wi + 1) * cin, wo * cout:(wo + 1) * cout] = w[:, dx]
        # dy blocks stacked along K -> single (3*W*Cin, W*Cout) MXU operand.
        return jnp.asarray(t.reshape(3 * W * cin, W * cout), compute_dtype)

    def tile_bias(b):
        b = np.asarray(jax.device_get(b), np.float32)
        return jnp.asarray(np.tile(b, W)[None, :], jnp.float32)

    return toeplitz(w1), tile_bias(b1), toeplitz(w2), tile_bias(b2)


# ----------------------------------------------------------------------------
# Grid-step batching heuristic.
# ----------------------------------------------------------------------------
def _choose_images_per_step(N, H, target_rows=256):
    """Largest divisor NB of N with NB*H <= target_rows.

    Raises the MXU M dimension per grid step (target 128-256 rows) and
    amortizes the ~0.35 us per-step overhead.  On v7x, prefer configurations
    where N // NB >= 2 so both TensorCores get work (re-derive per generation).
    """
    nb = 1
    for d in range(1, N + 1):
        if N % d == 0 and d * H <= target_rows:
            nb = d
    return nb


# ----------------------------------------------------------------------------
# Forward in the folded (N, H, W*C) layout (use this in-network to avoid the
# per-call NCHW <-> folded transposes).
# ----------------------------------------------------------------------------
def conv_block_forward_folded(x_folded, packed_params, *, out_dtype=jnp.float32):
    """x_folded: (N, H, W*Cin) -> (N, H, W*Cout) in `out_dtype`."""
    w1t, b1t, w2t, b2t = packed_params
    N, H, WCin = x_folded.shape
    WCout = b1t.shape[1]

    # Cast activations to the MXU compute dtype ONCE (halves input DMA bytes).
    x_folded = x_folded.astype(w1t.dtype)

    NB = _choose_images_per_step(N, H)
    grid = (N // NB,)

    return pl.pallas_call(
        _fused_conv_block_kernel,
        out_shape=jax.ShapeDtypeStruct((N, H, WCout), out_dtype),
        grid_spec=pltpu.PrefetchScalarGridSpec(
            num_scalar_prefetch=0,
            grid=grid,
            in_specs=[
                pl.BlockSpec((NB, H, WCin), lambda n: (n, 0, 0)),
                pl.BlockSpec(w1t.shape, lambda n: (0, 0)),   # constant -> stays resident
                pl.BlockSpec(b1t.shape, lambda n: (0, 0)),
                pl.BlockSpec(w2t.shape, lambda n: (0, 0)),
                pl.BlockSpec(b2t.shape, lambda n: (0, 0)),
            ],
            out_specs=pl.BlockSpec((NB, H, WCout), lambda n: (n, 0, 0)),
        ),
        compiler_params=pltpu.CompilerParams(
            dimension_semantics=("parallel",),
            vmem_limit_bytes=32 * 1024 * 1024),
    )(x_folded, w1t, b1t, w2t, b2t)


# ----------------------------------------------------------------------------
# Forward wrapper (PyTorch NCHW convention at the boundary).
# ----------------------------------------------------------------------------
def conv_block_forward(x_nchw, packed_params):
    """x_nchw: (N, Cin, H, W) -> (N, Cout, H, W); both convs fused in one call."""
    # TODO(synk): inside a larger network keep activations in the folded
    # (N, H, W*C) layout end-to-end (call conv_block_forward_folded directly)
    # and drop these two HBM-bound transposes, which at this size cost about
    # as much as the fused kernel itself.
    w1t, b1t, w2t, b2t = packed_params
    N, Cin, H, W = x_nchw.shape
    WCout = b1t.shape[1]
    Cout = WCout // W

    x_folded = jnp.transpose(x_nchw, (0, 2, 3, 1)).reshape(N, H, W * Cin)
    out_folded = conv_block_forward_folded(x_folded, packed_params,
                                           out_dtype=jnp.float32)
    return jnp.transpose(out_folded.reshape(N, H, W, Cout), (0, 3, 1, 2))


# ----------------------------------------------------------------------------
# Parameter init (shapes match nn.Conv2d(k=3, padding=1), HWIO layout).
# ----------------------------------------------------------------------------
def init_params(key, in_c, out_c):
    k1, k2, k3, k4 = jax.random.split(key, 4)
    w1 = jax.random.normal(k1, (3, 3, in_c, out_c), jnp.float32) * 0.1
    b1 = jax.random.normal(k2, (out_c,), jnp.float32) * 0.1
    w2 = jax.random.normal(k3, (3, 3, out_c, out_c), jnp.float32) * 0.1
    b2 = jax.random.normal(k4, (out_c,), jnp.float32) * 0.1
    return (w1, b1, w2, b2)


# ----------------------------------------------------------------------------
# Pure-JAX reference (emulates the kernel's bf16-operand / f32-accumulate math).
# ----------------------------------------------------------------------------
def _reference_forward(x_nchw, params, compute_dtype=jnp.bfloat16):
    w1, b1, w2, b2 = params
    dn = ("NCHW", "HWIO", "NCHW")

    def conv_relu(x, w, b):
        xc = x.astype(compute_dtype).astype(jnp.float32)
        wc = w.astype(compute_dtype).astype(jnp.float32)
        y = lax.conv_general_dilated(xc, wc, window_strides=(1, 1), padding="SAME",
                                     dimension_numbers=dn,
                                     precision=lax.Precision.HIGHEST)
        return jnp.maximum(y + b[None, :, None, None], 0.0)

    return conv_relu(conv_relu(x_nchw, w1, b1), w2, b2)


if __name__ == "__main__":
    N, in_c, out_c, H, W = 2, 4, 8, 16, 16

    key = jax.random.PRNGKey(0)
    kx, kp = jax.random.split(key)
    x = jax.random.normal(kx, (N, in_c, H, W), jnp.float32)
    params = init_params(kp, in_c, out_c)

    # One-time weight prep (host side, outside the jitted forward).
    packed = pack_conv_block_params(params, W=W, compute_dtype=jnp.bfloat16)

    fwd = jax.jit(conv_block_forward)
    out = jax.block_until_ready(fwd(x, packed))

    ref = _reference_forward(x, params, compute_dtype=jnp.bfloat16)
    assert out.shape == (N, out_c, H, W)
    max_err = float(jnp.max(jnp.abs(out - ref)))
    assert jnp.allclose(out, ref, atol=2e-2, rtol=2e-2), max_err

    print("KERNEL_OK")
</pallas_src>

<mosaic_0001>
module attributes {stable_mosaic.version = 11 : i64} {
  func.func @_fused_conv_block_kernel(%arg0: i32, %arg1: memref<2x16x64xbf16, #tpu.memory_space<vmem>>, %arg2: memref<192x128xbf16, #tpu.memory_space<vmem>>, %arg3: memref<1x128xf32, #tpu.memory_space<vmem>>, %arg4: memref<384x128xbf16, #tpu.memory_space<vmem>>, %arg5: memref<1x128xf32, #tpu.memory_space<vmem>>, %arg6: memref<2x16x128xf32, #tpu.memory_space<vmem>>) attributes {dimension_semantics = [#tpu.dimension_semantics<parallel>], iteration_bounds = array<i64: 1>, scalar_prefetch = 0 : i64, scratch_operands = 0 : i64, tpu.core_type = #tpu.core_type<tc>, window_params = [{transform_indices = @transform_0, window_bounds = array<i64: 2, 16, 64>}, {pipeline_mode = #tpu.pipeline_mode<synchronous>, transform_indices = @transform_1, window_bounds = array<i64: 192, 128>}, {pipeline_mode = #tpu.pipeline_mode<synchronous>, transform_indices = @transform_2, window_bounds = array<i64: 1, 128>}, {pipeline_mode = #tpu.pipeline_mode<synchronous>, transform_indices = @transform_3, window_bounds = array<i64: 384, 128>}, {pipeline_mode = #tpu.pipeline_mode<synchronous>, transform_indices = @transform_4, window_bounds = array<i64: 1, 128>}, {transform_indices = @transform_5, window_bounds = array<i64: 2, 16, 128>}]} {
    %c0 = arith.constant 0 : index
    %c0_0 = arith.constant 0 : index
    %c0_1 = arith.constant 0 : index
    %0 = vector.load %arg1[%c0, %c0_0, %c0_1] : memref<2x16x64xbf16, #tpu.memory_space<vmem>>, vector<2x16x64xbf16>
    %cst = arith.constant 0.000000e+00 : bf16
    %1 = vector.broadcast %cst : bf16 to vector<2x1x64xbf16>
    %2 = vector.extract_strided_slice %0 {offsets = [0, 0, 0], sizes = [2, 15, 64], strides = [1, 1, 1]} : vector<2x16x64xbf16> to vector<2x15x64xbf16>
    %3 = tpu.concatenate %1, %2 in 1 : vector<2x1x64xbf16>, vector<2x15x64xbf16> -> vector<2x16x64xbf16>
    %4 = vector.extract_strided_slice %0 {offsets = [0, 1, 0], sizes = [2, 15, 64], strides = [1, 1, 1]} : vector<2x16x64xbf16> to vector<2x15x64xbf16>
    %5 = tpu.concatenate %4, %1 in 1 : vector<2x15x64xbf16>, vector<2x1x64xbf16> -> vector<2x16x64xbf16>
    %6 = tpu.concatenate %3, %0, %5 in 2 : vector<2x16x64xbf16>, vector<2x16x64xbf16>, vector<2x16x64xbf16> -> vector<2x16x192xbf16>
    %7 = vector.shape_cast %6 : vector<2x16x192xbf16> to vector<32x192xbf16>
    %c0_2 = arith.constant 0 : index
    %c0_3 = arith.constant 0 : index
    %8 = vector.load %arg3[%c0_2, %c0_3] : memref<1x128xf32, #tpu.memory_space<vmem>>, vector<1x128xf32>
    %9 = vector.shape_cast %8 : vector<1x128xf32> to vector<1x128xf32>
    %10 = vector.broadcast %9 : vector<1x128xf32> to vector<32x128xf32>
    %c0_4 = arith.constant 0 : index
    %c0_5 = arith.constant 0 : index
    %11 = vector.load %arg2[%c0_4, %c0_5] : memref<192x128xbf16, #tpu.memory_space<vmem>>, vector<192x128xbf16>
    %cst_6 = arith.constant dense<0.000000e+00> : vector<32x128xf32>
    %12 = tpu.matmul %7, %11, %cst_6 {dimension_numbers = #tpu.dot_dimension_numbers<[1], [0], [0], [1], [0, 0, 1, 1], [], []>} : vector<32x192xbf16>, vector<192x128xbf16>, vector<32x128xf32> -> vector<32x128xf32>
    %13 = arith.addf %10, %12 : vector<32x128xf32>
    %cst_7 = arith.constant 0.000000e+00 : f32
    %14 = vector.broadcast %cst_7 : f32 to vector<32x128xf32>
    %15 = arith.maximumf %13, %14 : vector<32x128xf32>
    %16 = arith.truncf %15 : vector<32x128xf32> to vector<32x128xbf16>
    %17 = vector.shape_cast %16 : vector<32x128xbf16> to vector<2x16x128xbf16>
    %cst_8 = arith.constant 0.000000e+00 : bf16
    %18 = vector.broadcast %cst_8 : bf16 to vector<2x1x128xbf16>
    %19 = vector.extract_strided_slice %17 {offsets = [0, 0, 0], sizes = [2, 15, 128], strides = [1, 1, 1]} : vector<2x16x128xbf16> to vector<2x15x128xbf16>
    %20 = tpu.concatenate %18, %19 in 1 : vector<2x1x128xbf16>, vector<2x15x128xbf16> -> vector<2x16x128xbf16>
    %21 = vector.extract_strided_slice %17 {offsets = [0, 1, 0], sizes = [2, 15, 128], strides = [1, 1, 1]} : vector<2x16x128xbf16> to vector<2x15x128xbf16>
    %22 = tpu.concatenate %21, %18 in 1 : vector<2x15x128xbf16>, vector<2x1x128xbf16> -> vector<2x16x128xbf16>
    %23 = tpu.concatenate %20, %17, %22 in 2 : vector<2x16x128xbf16>, vector<2x16x128xbf16>, vector<2x16x128xbf16> -> vector<2x16x384xbf16>
    %24 = vector.shape_cast %23 : vector<2x16x384xbf16> to vector<32x384xbf16>
    %c0_9 = arith.constant 0 : index
    %c0_10 = arith.constant 0 : index
    %25 = vector.load %arg5[%c0_9, %c0_10] : memref<1x128xf32, #tpu.memory_space<vmem>>, vector<1x128xf32>
    %26 = vector.shape_cast %25 : vector<1x128xf32> to vector<1x128xf32>
    %27 = vector.broadcast %26 : vector<1x128xf32> to vector<32x128xf32>
    %c0_11 = arith.constant 0 : index
    %c0_12 = arith.constant 0 : index
    %28 = vector.load %arg4[%c0_11, %c0_12] : memref<384x128xbf16, #tpu.memory_space<vmem>>, vector<384x128xbf16>
    %cst_13 = arith.constant dense<0.000000e+00> : vector<32x128xf32>
    %29 = tpu.matmul %24, %28, %cst_13 {dimension_numbers = #tpu.dot_dimension_numbers<[1], [0], [0], [1], [0, 0, 1, 1], [], []>} : vector<32x384xbf16>, vector<384x128xbf16>, vector<32x128xf32> -> vector<32x128xf32>
    %30 = arith.addf %27, %29 : vector<32x128xf32>
    %cst_14 = arith.constant 0.000000e+00 : f32
    %31 = vector.broadcast %cst_14 : f32 to vector<32x128xf32>
    %32 = arith.maximumf %30, %31 : vector<32x128xf32>
    %33 = vector.shape_cast %32 : vector<32x128xf32> to vector<2x16x128xf32>
    %c0_15 = arith.constant 0 : index
    %c0_16 = arith.constant 0 : index
    %c0_17 = arith.constant 0 : index
    %34 = vector.load %arg6[%c0_15, %c0_16, %c0_17] : memref<2x16x128xf32, #tpu.memory_space<vmem>>, vector<2x16x128xf32>
    tpu.vector_store %arg6[%c0_15, %c0_16, %c0_17], %33 {strides = array<i32>} : memref<2x16x128xf32, #tpu.memory_space<vmem>>, vector<2x16x128xf32>,
    return
  }
  func.func @transform_0(%arg0: i32) -> (i32, i32, i32) {
    %c0_i32 = arith.constant 0 : i32
    %c0_i32_0 = arith.constant 0 : i32
    %c0_i32_1 = arith.constant 0 : i32
    return %arg0, %c0_i32, %c0_i32_0 : i32, i32, i32
  }
  func.func @transform_1(%arg0: i32) -> (i32, i32) {
    %c0_i32 = arith.constant 0 : i32
    %c0_i32_0 = arith.constant 0 : i32
    %c0_i32_1 = arith.constant 0 : i32
    return %c0_i32, %c0_i32_0 : i32, i32
  }
  func.func @transform_2(%arg0: i32) -> (i32, i32) {
    %c0_i32 = arith.constant 0 : i32
    %c0_i32_0 = arith.constant 0 : i32
    %c0_i32_1 = arith.constant 0 : i32
    return %c0_i32, %c0_i32_0 : i32, i32
  }
  func.func @transform_3(%arg0: i32) -> (i32, i32) {
    %c0_i32 = arith.constant 0 : i32
    %c0_i32_0 = arith.constant 0 : i32
    %c0_i32_1 = arith.constant 0 : i32
    return %c0_i32, %c0_i32_0 : i32, i32
  }
  func.func @transform_4(%arg0: i32) -> (i32, i32) {
    %c0_i32 = arith.constant 0 : i32
    %c0_i32_0 = arith.constant 0 : i32
    %c0_i32_1 = arith.constant 0 : i32
    return %c0_i32, %c0_i32_0 : i32, i32
  }
  func.func @transform_5(%arg0: i32) -> (i32, i32, i32) {
    %c0_i32 = arith.constant 0 : i32
    %c0_i32_0 = arith.constant 0 : i32
    %c0_i32_1 = arith.constant 0 : i32
    return %arg0, %c0_i32, %c0_i32_0 : i32, i32, i32
  }
}

</mosaic_0001>

<llo_original>
// kernel: conv_block_forward.1
$region0: #{conv_block_forward.1}
  #allocation0 [shape = 'u32[]', space=smem, size = 0x4, offset = 0x4, fixed_abs, tag = 'smem constant byte address 0x4 - core index']
  #allocation1 [shape = 'u32[144,128]{1,0:T(1,128)}', space=vmem, size = 0x12000, scoped, tag = 'internal scratch']
  %s0 = inlined_call_operand.vmem [shape: bf16[2,16,64], index: 0, kind: input, shape index: {}]
  %s1 = inlined_call_operand.vmem [shape: bf16[192,128], index: 1, kind: input, shape index: {}]
  %s2 = inlined_call_operand.vmem [shape: f32[1,128], index: 2, kind: input, shape index: {}]
  %s3 = inlined_call_operand.vmem [shape: bf16[384,128], index: 3, kind: input, shape index: {}]
  %s4 = inlined_call_operand.vmem [shape: f32[1,128], index: 4, kind: input, shape index: {}]
  %s5 = inlined_call_operand.vmem [shape: f32[2,16,128], index: 5, kind: output, shape index: {}]
  %s6 = sld [smem:[#allocation0]]
  $region30: #{conv_block_forward.1} parent=0
    _
  %s8 = ssub.s32 1, %s6
  %s9 = scalar_select 0, %s8, %s6
  // Predicated region
  $region2: #{conv_block_forward.1} parent=0 // pred_check
    _
  $region3: #{conv_block_forward.1} parent=0 // pred_check_branch
    %11 = sbr.rel (0) target = $region5
  $region4: #{conv_block_forward.1} parent=0 // pred_region
    _
  $region5: #{conv_block_forward.1} parent=0 // pred_fallthru
    _
  // Predicated region
  $region6: #{conv_block_forward.1} parent=0 // pred_check
    _
  $region7: #{conv_block_forward.1} parent=0 // pred_check_branch
    %13 = sbr.rel (0) target = $region9
  $region8: #{conv_block_forward.1} parent=0 // pred_region
    _
  $region9: #{conv_block_forward.1} parent=0 // pred_fallthru
    _
  // Predicated region
  $region10: #{conv_block_forward.1} parent=0 // pred_check
    _
  $region11: #{conv_block_forward.1} parent=0 // pred_check_branch
    %15 = sbr.rel (0) target = $region13
  $region12: #{conv_block_forward.1} parent=0 // pred_region
    _
  $region13: #{conv_block_forward.1} parent=0 // pred_fallthru
    _
  // Predicated region
  $region14: #{conv_block_forward.1} parent=0 // pred_check
    _
  $region15: #{conv_block_forward.1} parent=0 // pred_check_branch
    %17 = sbr.rel (0) target = $region17
  $region16: #{conv_block_forward.1} parent=0 // pred_region
    _
  $region17: #{conv_block_forward.1} parent=0 // pred_fallthru
    _
  // Predicated region
  $region18: #{conv_block_forward.1} parent=0 // pred_check
    _
  $region19: #{conv_block_forward.1} parent=0 // pred_check_branch
    %19 = sbr.rel (0) target = $region21
  $region20: #{conv_block_forward.1} parent=0 // pred_region
    _
  $region21: #{conv_block_forward.1} parent=0 // pred_fallthru
    _
  %v21 = vld [vmem:[%s0] sm:$0xf]
  %v22 = vld [vmem:[%s0 + $0x4] sm:$0xf]
  %v23 = vld [vmem:[%s0 + $0x8] sm:$0xf]
  %v24 = vld [vmem:[%s0 + $0xc] sm:$0xf]
  %v29 = vunpack.c.l.b16 %v21
  %v30 = vunpack.c.l.b16 %v22
  %v31 = vunpack.c.l.b16 %v23
  %v32 = vunpack.c.l.b16 %v24
  %v33 = vpack.c.b16 %v30, %v29
  %v34 = vpack.c.b16 %v32, %v31
  %v36 = vshrl.u32 %v33, 16
  %v38 = vrot.slane %v36, 7
  %v39 = vshll.u32 %v33, 16
  %v41 = vor.u32 %v38, %v39
  %v43 = vshrl.u32 %v34, 16
  %v45 = vrot.slane %v43, 7
  %v46 = vshll.u32 %v34, 16
  %v48 = vor.u32 %v45, %v46
  %vm51 = vcmask 1040384
  %vm52 = vsmask.f32 256
  %vm53 = vmand %vm51, %vm52
  %v54 = vsel %vm53, 0, %v41
  %v55 = vsel %vm53, 0, %v48
  %v56 = vrot.slane %v39, 1
  %v57 = vor.u32 %v36, %v56
  %v58 = vrot.slane %v46, 1
  %v59 = vor.u32 %v43, %v58
  %vm62 = vcmask 1047552
  %vm63 = vsmask.f32 7424
  %vm64 = vmand %vm62, %vm63
  %v65 = vsel %vm64, %v57, 0
  %v66 = vsel %vm64, %v59, 0
  %67 = vrot.lane.b32.xlu0 %v33, 64
  %v68 = vpop.permute.xlu0 %67
  %69 = vrot.lane.b32.xlu0 %v34, 64
  %v70 = vpop.permute.xlu0 %69
  %vm71 = vcmask 523264
  %v74 = vsel %vm71, %v54, %v68
  %v78 = vsel %vm71, %v55, %v70
  %v80 = vld [vmem:[%s2] sm:$0x1]
  %v82 = vlaneseq
  %v83 = vshrl.u32 %v82, 7
  %v84 = vsub.s32 0, %v83
  %v85 = vrot.slane %v80, %v84
  %v87 = vld [vmem:[%s1] sm:$0xf]
  %v88 = vld [vmem:[%s1 + $0x4] sm:$0xf]
  %v89 = vld [vmem:[%s1 + $0x8] sm:$0xf]
  %v90 = vld [vmem:[%s1 + $0xc] sm:$0xf]
  %v91 = vld [vmem:[%s1 + $0x10] sm:$0xf]
  %v92 = vld [vmem:[%s1 + $0x14] sm:$0xf]
  %v93 = vld [vmem:[%s1 + $0x18] sm:$0xf]
  %v94 = vld [vmem:[%s1 + $0x1c] sm:$0xf]
  %v95 = vld [vmem:[%s1 + $0x20] sm:$0xf]
  %v96 = vld [vmem:[%s1 + $0x24] sm:$0xf]
  %v97 = vld [vmem:[%s1 + $0x28] sm:$0xf]
  %v98 = vld [vmem:[%s1 + $0x2c] sm:$0xf]
  %v99 = vld [vmem:[%s1 + $0x30] sm:$0xf]
  %v100 = vld [vmem:[%s1 + $0x34] sm:$0xf]
  %v101 = vld [vmem:[%s1 + $0x38] sm:$0xf]
  %v102 = vld [vmem:[%s1 + $0x3c] sm:$0xf]
  %v103 = vld [vmem:[%s1 + $0x40] sm:$0xf]
  %v104 = vld [vmem:[%s1 + $0x44] sm:$0xf]
  %v105 = vld [vmem:[%s1 + $0x48] sm:$0xf]
  %v106 = vld [vmem:[%s1 + $0x4c] sm:$0xf]
  %v107 = vld [vmem:[%s1 + $0x50] sm:$0xf]
  %v108 = vld [vmem:[%s1 + $0x54] sm:$0xf]
  %v109 = vld [vmem:[%s1 + $0x58] sm:$0xf]
  %v110 = vld [vmem:[%s1 + $0x5c] sm:$0xf]
  %v135 = vunpack.c.l.b16 %v87
  %v136 = vunpack.c.l.b16 %v88
  %v137 = vunpack.c.l.b16 %v89
  %v138 = vunpack.c.l.b16 %v90
  %v139 = vunpack.c.l.b16 %v91
  %v140 = vunpack.c.l.b16 %v92
  %v141 = vunpack.c.l.b16 %v93
  %v142 = vunpack.c.l.b16 %v94
  %v143 = vunpack.c.l.b16 %v95
  %v144 = vunpack.c.l.b16 %v96
  %v145 = vunpack.c.l.b16 %v97
  %v146 = vunpack.c.l.b16 %v98
  %v147 = vunpack.c.l.b16 %v99
  %v148 = vunpack.c.l.b16 %v100
  %v149 = vunpack.c.l.b16 %v101
  %v150 = vunpack.c.l.b16 %v102
  %v151 = vunpack.c.l.b16 %v103
  %v152 = vunpack.c.l.b16 %v104
  %v153 = vunpack.c.l.b16 %v105
  %v154 = vunpack.c.l.b16 %v106
  %v155 = vunpack.c.l.b16 %v107
  %v156 = vunpack.c.l.b16 %v108
  %v157 = vunpack.c.l.b16 %v109
  %v158 = vunpack.c.l.b16 %v110
  %v159 = vpack.c.b16 %v136, %v135
  %v160 = vpack.c.b16 %v138, %v137
  %v161 = vpack.c.b16 %v140, %v139
  %v162 = vpack.c.b16 %v142, %v141
  %v163 = vpack.c.b16 %v144, %v143
  %v164 = vpack.c.b16 %v146, %v145
  %v165 = vpack.c.b16 %v148, %v147
  %v166 = vpack.c.b16 %v150, %v149
  %v167 = vpack.c.b16 %v152, %v151
  %v168 = vpack.c.b16 %v154, %v153
  %v169 = vpack.c.b16 %v156, %v155
  %v170 = vpack.c.b16 %v158, %v157
  %v184 = vsel %vm71, %v65, 0
  %v187 = vsel %vm71, %v66, 0
  %189 = vmatprep.subr.bf16.mxu0 0
  %190 = vmatpush1.bf16.msra.mxu0 %v159
  %191 = vmatprep.subr.bf16.mxu0 0
  %192 = vmatpush1.bf16.msra.mxu0 %v160
  %193 = vmatprep.subr.bf16.mxu0 0
  %194 = vmatpush1.bf16.msra.mxu0 %v161
  %195 = vmatprep.subr.bf16.mxu0 0
  %196 = vmatpush1.bf16.msra.mxu0 %v162
  %197 = vmatprep.subr.bf16.mxu0 0
  %198 = vmatpush1.bf16.msra.mxu0 %v163
  %199 = vmatprep.subr.bf16.mxu0 0
  %200 = vmatpush1.bf16.msra.mxu0 %v164
  %201 = vmatprep.subr.bf16.mxu0 0
  %202 = vmatpush1.bf16.msra.mxu0 %v165
  %203 = vmatprep.subr.bf16.mxu0 0
  %204 = vmatpush1.bf16.msra.mxu0 %v166
  %205 = vmatprep.subr.bf16.mxu0 0
  %206 = vmatpush1.bf16.msra.mxu0 %v167
  %207 = vmatprep.subr.bf16.mxu0 0
  %208 = vmatpush1.bf16.msra.mxu0 %v168
  %209 = vmatprep.subr.bf16.mxu0 0
  %210 = vmatpush1.bf16.msra.mxu0 %v169
  %211 = vmatprep.subr.bf16.mxu0 0
  %212 = vmatpush1.bf16.msra.mxu0 %v170
  %213 = vmatprep.subr.bf16.mxu0 0
  %214 = vmatpush1.bf16.msra.mxu0 0
  %215 = vmatprep.subr.bf16.mxu0 0
  %216 = vmatpush1.bf16.msra.mxu0 0
  %217 = vmatprep.subr.bf16.mxu0 0
  %218 = vmatpush1.bf16.msra.mxu0 0
  %219 = vmatprep.subr.bf16.mxu0 0
  %220 = vmatpush1.bf16.msra.mxu0 0
  %221 = vmatprep.mubr.bf16.mxu0 %v184
  %222 = vmatmul.mubr.bf16.gmra.mrb[0].mxu0 %v74
  %v223 = vpop.f32.mrb[0].mxu0
  %v224 = vadd.f32 0.0, %v223
  %v225 = vpop.f32.mrb[0].mxu0
  %v226 = vpop.f32.mrb[0].mxu0
  %v227 = vadd.f32 0.0, %v226
  %v228 = vpop.f32.mrb[0].mxu0
  %229 = vmatprep.mubr.bf16.mxu0 %v187
  %230 = vmatmul.mubr.bf16.gmra.mrb[0].mxu0 %v78
  %v231 = vpop.f32.mrb[0].mxu0
  %v232 = vadd.f32 0.0, %v231
  %v233 = vpop.f32.mrb[0].mxu0
  %v234 = vpop.f32.mrb[0].mxu0
  %v235 = vadd.f32 0.0, %v234
  %v236 = vpop.f32.mrb[0].mxu0
  %237 = vdwg.mxu0
  %v238 = vadd.f32 %v85, %v224
  %v239 = vadd.f32 %v85, %v227
  %v240 = vadd.f32 %v85, %v232
  %v241 = vadd.f32 %v85, %v235
  %v242 = vmax.f32 %v238, 0.0
  %v243 = vmax.f32 %v239, 0.0
  %v244 = vmax.f32 %v240, 0.0
  %v245 = vmax.f32 %v241, 0.0
  %v246 = vpack.c.bf16 %v243, %v242
  %v247 = vpack.c.bf16 %v245, %v244
  %v249 = vshrl.u32 %v246, 16
  %v251 = vrot.slane %v249, 7
  %v252 = vshll.u32 %v246, 16
  %v254 = vor.u32 %v251, %v252
  %v256 = vshrl.u32 %v247, 16
  %v258 = vrot.slane %v256, 7
  %v259 = vshll.u32 %v247, 16
  %v261 = vor.u32 %v258, %v259
  %v264 = vsel %vm53, 0, %v254
  %v265 = vsel %vm53, 0, %v261
  %v266 = vrot.slane %v252, 1
  %v267 = vor.u32 %v249, %v266
  %v268 = vrot.slane %v259, 1
  %v269 = vor.u32 %v256, %v268
  %v272 = vsel %vm64, %v267, 0
  %v273 = vsel %vm64, %v269, 0
  %v274 = vld [vmem:[%s4] sm:$0x1]
  %v276 = vlaneseq
  %v277 = vshrl.u32 %v276, 7
  %v278 = vsub.s32 0, %v277
  %v279 = vrot.slane %v274, %v278
  %v281 = vld [vmem:[%s3] sm:$0xf]
  %v282 = vld [vmem:[%s3 + $0x4] sm:$0xf]
  %v283 = vld [vmem:[%s3 + $0x8] sm:$0xf]
  %v284 = vld [vmem:[%s3 + $0xc] sm:$0xf]
  %v285 = vld [vmem:[%s3 + $0x10] sm:$0xf]
  %v286 = vld [vmem:[%s3 + $0x14] sm:$0xf]
  %v287 = vld [vmem:[%s3 + $0x18] sm:$0xf]
  %v288 = vld [vmem:[%s3 + $0x1c] sm:$0xf]
  %v289 = vld [vmem:[%s3 + $0x20] sm:$0xf]
  %v290 = vld [vmem:[%s3 + $0x24] sm:$0xf]
  %v291 = vld [vmem:[%s3 + $0x28] sm:$0xf]
  %v292 = vld [vmem:[%s3 + $0x2c] sm:$0xf]
  %v293 = vld [vmem:[%s3 + $0x30] sm:$0xf]
  %v294 = vld [vmem:[%s3 + $0x34] sm:$0xf]
  %v295 = vld [vmem:[%s3 + $0x38] sm:$0xf]
  %v296 = vld [vmem:[%s3 + $0x3c] sm:$0xf]
  %v297 = vld [vmem:[%s3 + $0x40] sm:$0xf]
  %v298 = vld [vmem:[%s3 + $0x44] sm:$0xf]
  %v299 = vld [vmem:[%s3 + $0x48] sm:$0xf]
  %v300 = vld [vmem:[%s3 + $0x4c] sm:$0xf]
  %v301 = vld [vmem:[%s3 + $0x50] sm:$0xf]
  %v302 = vld [vmem:[%s3 + $0x54] sm:$0xf]
  %v303 = vld [vmem:[%s3 + $0x58] sm:$0xf]
  %v304 = vld [vmem:[%s3 + $0x5c] sm:$0xf]
  %v305 = vld [vmem:[%s3 + $0x60] sm:$0xf]
  %v306 = vld [vmem:[%s3 + $0x64] sm:$0xf]
  %v307 = vld [vmem:[%s3 + $0x68] sm:$0xf]
  %v308 = vld [vmem:[%s3 + $0x6c] sm:$0xf]
  %v309 = vld [vmem:[%s3 + $0x70] sm:$0xf]
  %v310 = vld [vmem:[%s3 + $0x74] sm:$0xf]
  %v311 = vld [vmem:[%s3 + $0x78] sm:$0xf]
  %v312 = vld [vmem:[%s3 + $0x7c] sm:$0xf]
  %v313 = vld [vmem:[%s3 + $0x80] sm:$0xf]
  %v314 = vld [vmem:[%s3 + $0x84] sm:$0xf]
  %v315 = vld [vmem:[%s3 + $0x88] sm:$0xf]
  %v316 = vld [vmem:[%s3 + $0x8c] sm:$0xf]
  %v317 = vld [vmem:[%s3 + $0x90] sm:$0xf]
  %v318 = vld [vmem:[%s3 + $0x94] sm:$0xf]
  %v319 = vld [vmem:[%s3 + $0x98] sm:$0xf]
  %v320 = vld [vmem:[%s3 + $0x9c] sm:$0xf]
  %v321 = vld [vmem:[%s3 + $0xa0] sm:$0xf]
  %v322 = vld [vmem:[%s3 + $0xa4] sm:$0xf]
  %v323 = vld [vmem:[%s3 + $0xa8] sm:$0xf]
  %v324 = vld [vmem:[%s3 + $0xac] sm:$0xf]
  %v325 = vld [vmem:[%s3 + $0xb0] sm:$0xf]
  %v326 = vld [vmem:[%s3 + $0xb4] sm:$0xf]
  %v327 = vld [vmem:[%s3 + $0xb8] sm:$0xf]
  %v328 = vld [vmem:[%s3 + $0xbc] sm:$0xf]
  %v377 = vunpack.c.l.b16 %v281
  %v378 = vunpack.c.l.b16 %v282
  %v379 = vunpack.c.l.b16 %v283
  %v380 = vunpack.c.l.b16 %v284
  %v381 = vunpack.c.l.b16 %v285
  %v382 = vunpack.c.l.b16 %v286
  %v383 = vunpack.c.l.b16 %v287
  %v384 = vunpack.c.l.b16 %v288
  %v385 = vunpack.c.l.b16 %v289
  %v386 = vunpack.c.l.b16 %v290
  %v387 = vunpack.c.l.b16 %v291
  %v388 = vunpack.c.l.b16 %v292
  %v389 = vunpack.c.l.b16 %v293
  %v390 = vunpack.c.l.b16 %v294
  %v391 = vunpack.c.l.b16 %v295
  %v392 = vunpack.c.l.b16 %v296
  %v393 = vunpack.c.l.b16 %v297
  %v394 = vunpack.c.l.b16 %v298
  %v395 = vunpack.c.l.b16 %v299
  %v396 = vunpack.c.l.b16 %v300
  %v397 = vunpack.c.l.b16 %v301
  %v398 = vunpack.c.l.b16 %v302
  %v399 = vunpack.c.l.b16 %v303
  %v400 = vunpack.c.l.b16 %v304
  %v401 = vunpack.c.l.b16 %v305
  %v402 = vunpack.c.l.b16 %v306
  %v403 = vunpack.c.l.b16 %v307
  %v404 = vunpack.c.l.b16 %v308
  %v405 = vunpack.c.l.b16 %v309
  %v406 = vunpack.c.l.b16 %v310
  %v407 = vunpack.c.l.b16 %v311
  %v408 = vunpack.c.l.b16 %v312
  %v409 = vunpack.c.l.b16 %v313
  %v410 = vunpack.c.l.b16 %v314
  %v411 = vunpack.c.l.b16 %v315
  %v412 = vunpack.c.l.b16 %v316
  %v413 = vunpack.c.l.b16 %v317
  %v414 = vunpack.c.l.b16 %v318
  %v415 = vunpack.c.l.b16 %v319
  %v416 = vunpack.c.l.b16 %v320
  %v417 = vunpack.c.l.b16 %v321
  %v418 = vunpack.c.l.b16 %v322
  %v419 = vunpack.c.l.b16 %v323
  %v420 = vunpack.c.l.b16 %v324
  %v421 = vunpack.c.l.b16 %v325
  %v422 = vunpack.c.l.b16 %v326
  %v423 = vunpack.c.l.b16 %v327
  %v424 = vunpack.c.l.b16 %v328
  %v425 = vpack.c.b16 %v378, %v377
  %v426 = vpack.c.b16 %v380, %v379
  %v427 = vpack.c.b16 %v382, %v381
  %v428 = vpack.c.b16 %v384, %v383
  %v429 = vpack.c.b16 %v386, %v385
  %v430 = vpack.c.b16 %v388, %v387
  %v431 = vpack.c.b16 %v390, %v389
  %v432 = vpack.c.b16 %v392, %v391
  %v433 = vpack.c.b16 %v394, %v393
  %v434 = vpack.c.b16 %v396, %v395
  %v435 = vpack.c.b16 %v398, %v397
  %v436 = vpack.c.b16 %v400, %v399
  %v437 = vpack.c.b16 %v402, %v401
  %v438 = vpack.c.b16 %v404, %v403
  %v439 = vpack.c.b16 %v406, %v405
  %v440 = vpack.c.b16 %v408, %v407
  %v441 = vpack.c.b16 %v410, %v409
  %v442 = vpack.c.b16 %v412, %v411
  %v443 = vpack.c.b16 %v414, %v413
  %v444 = vpack.c.b16 %v416, %v415
  %v445 = vpack.c.b16 %v418, %v417
  %v446 = vpack.c.b16 %v420, %v419
  %v447 = vpack.c.b16 %v422, %v421
  %v448 = vpack.c.b16 %v424, %v423
  %473 = vmatprep.subr.bf16.mxu0 0
  %474 = vmatpush1.bf16.msra.mxu0 %v425
  %475 = vmatprep.subr.bf16.mxu0 0
  %476 = vmatpush1.bf16.msra.mxu0 %v426
  %477 = vmatprep.subr.bf16.mxu0 0
  %478 = vmatpush1.bf16.msra.mxu0 %v427
  %479 = vmatprep.subr.bf16.mxu0 0
  %480 = vmatpush1.bf16.msra.mxu0 %v428
  %481 = vmatprep.subr.bf16.mxu0 0
  %482 = vmatpush1.bf16.msra.mxu0 %v429
  %483 = vmatprep.subr.bf16.mxu0 0
  %484 = vmatpush1.bf16.msra.mxu0 %v430
  %485 = vmatprep.subr.bf16.mxu0 0
  %486 = vmatpush1.bf16.msra.mxu0 %v431
  %487 = vmatprep.subr.bf16.mxu0 0
  %488 = vmatpush1.bf16.msra.mxu0 %v432
  %489 = vmatprep.subr.bf16.mxu0 0
  %490 = vmatpush1.bf16.msra.mxu0 %v433
  %491 = vmatprep.subr.bf16.mxu0 0
  %492 = vmatpush1.bf16.msra.mxu0 %v434
  %493 = vmatprep.subr.bf16.mxu0 0
  %494 = vmatpush1.bf16.msra.mxu0 %v435
  %495 = vmatprep.subr.bf16.mxu0 0
  %496 = vmatpush1.bf16.msra.mxu0 %v436
  %497 = vmatprep.subr.bf16.mxu0 0
  %498 = vmatpush1.bf16.msra.mxu0 %v437
  %499 = vmatprep.subr.bf16.mxu0 0
  %500 = vmatpush1.bf16.msra.mxu0 %v438
  %501 = vmatprep.subr.bf16.mxu0 0
  %502 = vmatpush1.bf16.msra.mxu0 %v439
  %503 = vmatprep.subr.bf16.mxu0 0
  %504 = vmatpush1.bf16.msra.mxu0 %v440
  %505 = vmatprep.mubr.bf16.mxu0 %v246
  %506 = vmatmul.mubr.bf16.gmra.mrb[0].mxu0 %v264
  %v507 = vpop.f32.mrb[0].mxu0
  %v508 = vadd.f32 0.0, %v507
  %v509 = vpop.f32.mrb[0].mxu0
  %v510 = vpop.f32.mrb[0].mxu0
  %v511 = vadd.f32 0.0, %v510
  %v512 = vpop.f32.mrb[0].mxu0
  %513 = vmatprep.mubr.bf16.mxu0 %v247
  %514 = vmatmul.mubr.bf16.gmra.mrb[0].mxu0 %v265
  %v515 = vpop.f32.mrb[0].mxu0
  %v516 = vadd.f32 0.0, %v515
  %v517 = vpop.f32.mrb[0].mxu0
  %v518 = vpop.f32.mrb[0].mxu0
  %v519 = vadd.f32 0.0, %v518
  %v520 = vpop.f32.mrb[0].mxu0
  %521 = vdwg.mxu0
  %522 = vmatprep.subr.bf16.mxu0 0
  %523 = vmatpush1.bf16.msra.mxu0 %v441
  %524 = vmatprep.subr.bf16.mxu0 0
  %525 = vmatpush1.bf16.msra.mxu0 %v442
  %526 = vmatprep.subr.bf16.mxu0 0
  %527 = vmatpush1.bf16.msra.mxu0 %v443
  %528 = vmatprep.subr.bf16.mxu0 0
  %529 = vmatpush1.bf16.msra.mxu0 %v444
  %530 = vmatprep.subr.bf16.mxu0 0
  %531 = vmatpush1.bf16.msra.mxu0 %v445
  %532 = vmatprep.subr.bf16.mxu0 0
  %533 = vmatpush1.bf16.msra.mxu0 %v446
  %534 = vmatprep.subr.bf16.mxu0 0
  %535 = vmatpush1.bf16.msra.mxu0 %v447
  %536 = vmatprep.subr.bf16.mxu0 0
  %537 = vmatpush1.bf16.msra.mxu0 %v448
  %538 = vmatprep.subr.bf16.mxu0 0
  %539 = vmatpush1.bf16.msra.mxu0 0
  %540 = vmatprep.subr.bf16.mxu0 0
  %541 = vmatpush1.bf16.msra.mxu0 0
  %542 = vmatprep.subr.bf16.mxu0 0
  %543 = vmatpush1.bf16.msra.mxu0 0
  %544 = vmatprep.subr.bf16.mxu0 0
  %545 = vmatpush1.bf16.msra.mxu0 0
  %546 = vmatprep.subr.bf16.mxu0 0
  %547 = vmatpush1.bf16.msra.mxu0 0
  %548 = vmatprep.subr.bf16.mxu0 0
  %549 = vmatpush1.bf16.msra.mxu0 0
  %550 = vmatprep.subr.bf16.mxu0 0
  %551 = vmatpush1.bf16.msra.mxu0 0
  %552 = vmatprep.subr.bf16.mxu0 0
  %553 = vmatpush1.bf16.msra.mxu0 0
  %554 = vmatprep.mubr.bf16.mxu0 0
  %555 = vmatmul.mubr.bf16.gmra.mrb[0].mxu0 %v272
  %v556 = vpop.f32.mrb[0].mxu0
  %v557 = vadd.f32 %v508, %v556
  %v558 = vpop.f32.mrb[0].mxu0
  %v559 = vpop.f32.mrb[0].mxu0
  %v560 = vadd.f32 %v511, %v559
  %v561 = vpop.f32.mrb[0].mxu0
  %562 = vmatprep.mubr.bf16.mxu0 0
  %563 = vmatmul.mubr.bf16.gmra.mrb[0].mxu0 %v273
  %v564 = vpop.f32.mrb[0].mxu0
  %v565 = vadd.f32 %v516, %v564
  %v566 = vpop.f32.mrb[0].mxu0
  %v567 = vpop.f32.mrb[0].mxu0
  %v568 = vadd.f32 %v519, %v567
  %v569 = vpop.f32.mrb[0].mxu0
  %570 = vdwg.mxu0
  %v571 = vadd.f32 %v279, %v557
  %v572 = vadd.f32 %v279, %v560
  %v573 = vadd.f32 %v279, %v565
  %v574 = vadd.f32 %v279, %v568
  %v575 = vmax.f32 %v571, 0.0
  %v576 = vmax.f32 %v572, 0.0
  %v577 = vmax.f32 %v573, 0.0
  %v578 = vmax.f32 %v574, 0.0
  %579 = vst [vmem:[%s5] sm:$0xff] %v575
  %580 = vst [vmem:[%s5 + $0x8] sm:$0xff] %v576
  %581 = vst [vmem:[%s5 + $0x10] sm:$0xff] %v577
  %582 = vst [vmem:[%s5 + $0x18] sm:$0xff] %v578
  // Predicated region
  $region22: #{conv_block_forward.1} parent=0 // pred_check
    _
  $region23: #{conv_block_forward.1} parent=0 // pred_check_branch
    %584 = sbr.rel (0) target = $region25
  $region24: #{conv_block_forward.1} parent=0 // pred_region
    _
  $region25: #{conv_block_forward.1} parent=0 // pred_fallthru
    _
  // Predicated region
  $region26: #{conv_block_forward.1} parent=0 // pred_check
    _
  $region27: #{conv_block_forward.1} parent=0 // pred_check_branch
    %586 = sbr.rel (0) target = $region29
  $region28: #{conv_block_forward.1} parent=0 // pred_region
    _
  $region29: #{conv_block_forward.1} parent=0 // pred_fallthru
    _

</llo_original>
